<compile_context>
chip_gen: v7x
topology: tpu7x:2x2x1
jax: 0.10.0
libtpu: 0.0.40
codegen_flags: <defaults>
</compile_context>

<pallas_src>
import jax
import jax.numpy as jnp
from jax.experimental import pallas as pl
from jax.experimental.pallas import tpu as pltpu


def _round_up(x, m):
    return (x + m - 1) // m * m


def dlinear_kernel(x_ref, wt_ref, b_ref, o_ref):
    # x_ref:  [tile_b, in_dim]   (VMEM)
    # wt_ref: [in_dim, tile_n]   (VMEM)
    # b_ref:  [1, tile_n]        (VMEM)
    # o_ref:  [tile_b, tile_n]   (VMEM)
    acc = jnp.dot(x_ref[...], wt_ref[...], preferred_element_type=jnp.float32)
    o_ref[...] = (acc + b_ref[...]).astype(o_ref.dtype)


def prepare_dlinear_params(weight, bias, compute_dtype=jnp.float32):
    """One-time parameter prep (init time, not per forward call): transpose to
    [in, out] and zero-pad ONLY the output (lane) dim so stores are lane-dense.
    K is left unpadded so it matches the unpadded activations exactly."""
    out_dim, in_dim = weight.shape
    lane = 256 if out_dim > 128 else 128      # 256-wide N tiles fill v6e/v7x MXU
    out_p = _round_up(out_dim, lane)
    wt = jnp.zeros((in_dim, out_p), compute_dtype)
    wt = wt.at[:, :out_dim].set(weight.T.astype(compute_dtype))
    b = jnp.zeros((1, out_p), jnp.float32)
    b = b.at[0, :out_dim].set(bias.astype(jnp.float32))
    return wt, b


def _choose_tile_b(B, in_dim, itemsize, sub):
    # One x tile <= ~8 MiB (double-buffered -> 16 MiB) so the total working set
    # stays well under v7x's 64 MiB VMEM even for large in_dim.
    budget = 8 << 20
    cap = max(sub, min(256, (budget // max(in_dim * itemsize, 1)) // sub * sub))
    # Aim for >=2 batch tiles when B allows: gives v7x's two TensorCores work
    # and the BlockSpec pipeline something to overlap.
    if B >= 2 * sub:
        target = _round_up(-(-B // 2), sub)
    else:
        target = _round_up(B, sub)
    tile_b = min(cap, target)
    if tile_b >= B:
        tile_b = B          # single full-extent block: no partial batch block
    return tile_b


def _choose_tile_n(in_dim, out_p, itemsize):
    # N-tile granularity matches the weight padding (256 fills the v6e/v7x MXU).
    step = 256 if (out_p % 256 == 0 and out_p >= 256) else 128
    budget = 8 << 20        # one weight tile <= ~8 MiB (double-buffered)
    cap = max(step, min(2048, (budget // max(in_dim * itemsize, 1)) // step * step))
    tile_n = min(out_p, cap)
    while out_p % tile_n:   # out_p is a multiple of step, so this terminates
        tile_n -= step
    return tile_n


def dlinear_forward(x, wt, b, out_dim, compute_dtype=jnp.float32):
    """x: [B, seq, feat]; wt: prepared [in_dim, out_p]; b: prepared [1, out_p]."""
    B = x.shape[0]
    x2d = x.reshape(B, -1).astype(compute_dtype)   # same glue as torch .view(B, -1)
    in_dim = x2d.shape[1]
    assert wt.shape[0] == in_dim, (wt.shape, in_dim)
    out_p = wt.shape[1]
    out_dtype = x.dtype
    itemsize = jnp.dtype(compute_dtype).itemsize
    out_itemsize = jnp.dtype(out_dtype).itemsize

    sub = 16 if itemsize == 2 else 8
    tile_b = _choose_tile_b(B, in_dim, itemsize, sub)
    tile_n = _choose_tile_n(in_dim, out_p, itemsize)
    grid_b = pl.cdiv(B, tile_b)
    grid_n = out_p // tile_n

    x_bytes = B * in_dim * itemsize
    w_bytes = in_dim * out_p * itemsize

    # Loop order: keep the operand whose HBM re-read cost would be larger
    # VMEM-resident (last grid axis iterates fastest).
    #   x-stationary (out tiles innermost): W streamed grid_b times, x once.
    #   w-stationary (batch tiles innermost): x streamed grid_n times, W once.
    weight_stationary = (grid_n - 1) * x_bytes < (grid_b - 1) * w_bytes

    if weight_stationary:
        grid = (grid_n, grid_b)
        x_map = lambda j, i: (i, 0)
        w_map = lambda j, i: (0, j)
        o_map = lambda j, i: (i, j)
    else:
        grid = (grid_b, grid_n)
        x_map = lambda i, j: (i, 0)
        w_map = lambda i, j: (0, j)
        o_map = lambda i, j: (i, j)

    # VMEM working set (already includes Pallas' default double buffering).
    est = (2 * (tile_b * in_dim + in_dim * tile_n) * itemsize
           + 2 * tile_n * 4
           + 2 * tile_b * tile_n * out_itemsize)
    vmem_limit = int(min(max(int(est * 1.25), 16 << 20), 48 << 20))

    # Accurate streaming byte count (advisory; helps XLA overlap neighbours).
    w_reads = 1 if grid_n == 1 else (1 if weight_stationary else grid_b)
    x_reads = 1 if grid_b == 1 else (grid_n if weight_stationary else 1)
    cost = pl.CostEstimate(
        flops=2 * B * in_dim * out_p,
        transcendentals=0,
        bytes_accessed=int(x_reads * x_bytes + w_reads * w_bytes
                           + out_p * 4 + B * out_p * out_itemsize),
    )

    # TODO(synk): for extremely large in_dim (a K-slab no longer fits VMEM) add
    # an "arbitrary" K grid axis with an f32 VMEM accumulator; not needed at
    # DLinear scale (seq<=720, moderate channel counts).
    # TODO(synk): if profiling shows exposed DMA on shallow grids, add
    # pipeline_mode=pl.Buffered(3) on the streamed operand's BlockSpec
    # (re-check the v7x 64 MiB VMEM budget first).
    out_full = pl.pallas_call(
        dlinear_kernel,
        out_shape=jax.ShapeDtypeStruct((B, out_p), out_dtype),
        grid_spec=pltpu.PrefetchScalarGridSpec(
            num_scalar_prefetch=0,
            grid=grid,
            in_specs=[
                pl.BlockSpec((tile_b, in_dim), x_map),
                pl.BlockSpec((in_dim, tile_n), w_map),
                pl.BlockSpec((1, tile_n), w_map),
            ],
            out_specs=pl.BlockSpec((tile_b, tile_n), o_map),
        ),
        compiler_params=pltpu.CompilerParams(
            dimension_semantics=("parallel", "parallel"),
            vmem_limit_bytes=vmem_limit,
        ),
        cost_estimate=cost,
    )(x2d, wt, b)

    # Only the N padding is sliced off; output already has the final dtype.
    return out_full[:, :out_dim]


if __name__ == "__main__":
    # Small analogue of the module: sequence_length=8, n_features=4,
    # prediction_length=3 -> input_size=32, output_size=12.
    seq_len = 8
    n_feat = 4
    pred_len = 3
    input_size = seq_len * n_feat      # 32
    output_size = pred_len * n_feat    # 12

    key = jax.random.PRNGKey(0)
    kx, kw, kb, kx2 = jax.random.split(key, 4)

    bound = 1.0 / (input_size ** 0.5)   # nn.Linear default init range
    weight = jax.random.uniform(kw, (output_size, input_size),
                                minval=-bound, maxval=bound, dtype=jnp.float32)
    bias = jax.random.uniform(kb, (output_size,),
                              minval=-bound, maxval=bound, dtype=jnp.float32)

    # ---- f32 compute path: bit-tight reference check ----------------------
    x = jax.random.normal(kx, (2, seq_len, n_feat), dtype=jnp.float32)
    wt_f32, b_f32 = prepare_dlinear_params(weight, bias, compute_dtype=jnp.float32)
    out = jax.block_until_ready(
        dlinear_forward(x, wt_f32, b_f32, output_size, compute_dtype=jnp.float32))
    ref = x.reshape(x.shape[0], -1) @ weight.T + bias
    assert out.shape == (2, output_size), out.shape
    assert jnp.allclose(out, ref, atol=1e-5, rtol=1e-5), "f32 mismatch vs reference"

    # ---- bf16 compute path (halves HBM bytes on v6e/v7x): loose check -----
    # Also exercises multi-tile batch grid + partial last batch block.
    x2 = jax.random.normal(kx2, (40, seq_len, n_feat), dtype=jnp.float32)
    wt_bf, b_bf = prepare_dlinear_params(weight, bias, compute_dtype=jnp.bfloat16)
    out2 = jax.block_until_ready(
        dlinear_forward(x2, wt_bf, b_bf, output_size, compute_dtype=jnp.bfloat16))
    ref2 = x2.reshape(x2.shape[0], -1) @ weight.T + bias
    assert out2.shape == (40, output_size), out2.shape
    assert jnp.allclose(out2.astype(jnp.float32), ref2, atol=1e-1, rtol=1e-1), \
        "bf16 mismatch vs reference"

    print("KERNEL_OK")
</pallas_src>

<mosaic_0001>
module attributes {stable_mosaic.version = 11 : i64} {
  func.func @dlinear_kernel(%arg0: i32, %arg1: i32, %arg2: memref<2x32xf32, #tpu.memory_space<vmem>>, %arg3: memref<32x128xf32, #tpu.memory_space<vmem>>, %arg4: memref<1x128xf32, #tpu.memory_space<vmem>>, %arg5: memref<2x128xf32, #tpu.memory_space<vmem>>) attributes {dimension_semantics = [#tpu.dimension_semantics<parallel>, #tpu.dimension_semantics<parallel>], iteration_bounds = array<i64: 1, 1>, scalar_prefetch = 0 : i64, scratch_operands = 0 : i64, tpu.core_type = #tpu.core_type<tc>, window_params = [{transform_indices = @transform_0, window_bounds = array<i64: 2, 32>}, {transform_indices = @transform_1, window_bounds = array<i64: 32, 128>}, {transform_indices = @transform_2, window_bounds = array<i64: 1, 128>}, {transform_indices = @transform_3, window_bounds = array<i64: 2, 128>}]} {
    %c0 = arith.constant 0 : index
    %c0_0 = arith.constant 0 : index
    %0 = vector.load %arg2[%c0, %c0_0] : memref<2x32xf32, #tpu.memory_space<vmem>>, vector<2x32xf32>
    %c0_1 = arith.constant 0 : index
    %c0_2 = arith.constant 0 : index
    %1 = vector.load %arg3[%c0_1, %c0_2] : memref<32x128xf32, #tpu.memory_space<vmem>>, vector<32x128xf32>
    %cst = arith.constant dense<0.000000e+00> : vector<2x128xf32>
    %2 = tpu.matmul %0, %1, %cst {dimension_numbers = #tpu.dot_dimension_numbers<[1], [0], [0], [1], [0, 0, 1, 1], [], []>} : vector<2x32xf32>, vector<32x128xf32>, vector<2x128xf32> -> vector<2x128xf32>
    %c0_3 = arith.constant 0 : index
    %c0_4 = arith.constant 0 : index
    %3 = vector.load %arg4[%c0_3, %c0_4] : memref<1x128xf32, #tpu.memory_space<vmem>>, vector<1x128xf32>
    %4 = vector.broadcast %3 : vector<1x128xf32> to vector<2x128xf32>
    %5 = arith.addf %2, %4 : vector<2x128xf32>
    %c0_5 = arith.constant 0 : index
    %c0_6 = arith.constant 0 : index
    %6 = vector.load %arg5[%c0_5, %c0_6] : memref<2x128xf32, #tpu.memory_space<vmem>>, vector<2x128xf32>
    tpu.vector_store %arg5[%c0_5, %c0_6], %5 {strides = array<i32>} : memref<2x128xf32, #tpu.memory_space<vmem>>, vector<2x128xf32>,
    return
  }
  func.func @transform_0(%arg0: i32, %arg1: i32) -> (i32, i32) {
    %c0_i32 = arith.constant 0 : i32
    %c0_i32_0 = arith.constant 0 : i32
    return %arg0, %c0_i32 : i32, i32
  }
  func.func @transform_1(%arg0: i32, %arg1: i32) -> (i32, i32) {
    %c0_i32 = arith.constant 0 : i32
    %c0_i32_0 = arith.constant 0 : i32
    return %c0_i32, %arg1 : i32, i32
  }
  func.func @transform_2(%arg0: i32, %arg1: i32) -> (i32, i32) {
    %c0_i32 = arith.constant 0 : i32
    %c0_i32_0 = arith.constant 0 : i32
    return %c0_i32, %arg1 : i32, i32
  }
  func.func @transform_3(%arg0: i32, %arg1: i32) -> (i32, i32) {
    %c0_i32 = arith.constant 0 : i32
    return %arg0, %arg1 : i32, i32
  }
}

</mosaic_0001>

<llo_original>
// kernel: tpu_custom_call.1
$region0: #{tpu_custom_call.1}
  #allocation0 [shape = 'u32[]', space=smem, size = 0x4, offset = 0x4, fixed_abs, tag = 'smem constant byte address 0x4 - core index']
  #allocation1 [shape = 'u32[144,128]{1,0:T(1,128)}', space=vmem, size = 0x12000, scoped, tag = 'internal scratch']
  %s0 = inlined_call_operand.hbm [shape: f32[2,32], index: 0, kind: input, shape index: {}]
  %s1 = inlined_call_operand.hbm [shape: f32[32,128], index: 1, kind: input, shape index: {}]
  %s2 = inlined_call_operand.vmem [shape: f32[1,128], index: 2, kind: input, shape index: {}]
  %s3 = inlined_call_operand.hbm [shape: f32[2,128], index: 3, kind: output, shape index: {}]
  %s4 = sld [smem:[#allocation0]]
  $region30: #{tpu_custom_call.1} parent=0
    _
  %s6 = ssub.s32 1, %s4
  %s7 = scalar_select 0, %s6, %s4
  $region1: #{tpu_custom_call.1} parent=0
    #allocation2 [shape = 'u8[1024]{0}', space=vmem, size = 0x400, scoped, tag = 'input window, operand 0, single buffered']
    #allocation3 [shape = 's32[1]{0}', space=sflag, size = 0x4, scoped, tag = 'scoped memory for tpu_custom_call.1']
    #allocation4 [shape = 's32[1]{0}', space=sflag, size = 0x4, scoped, tag = 'scoped memory for tpu_custom_call.1']
    #allocation5 [shape = 'u8[16384]{0}', space=vmem, size = 0x4000, scoped, tag = 'input window, operand 1, single buffered']
    #allocation6 [shape = 's32[1]{0}', space=sflag, size = 0x4, scoped, tag = 'scoped memory for tpu_custom_call.1']
    #allocation7 [shape = 'u8[1024]{0}', space=vmem, size = 0x400, scoped, tag = 'output window, operand 0, single buffered']
    %8 = vsyncpa [#allocation3], 0
    %9 = vsyncpa [#allocation6], 0
    %10 = vsyncpa [#allocation4], 0
    // Predicated region
    $region2: #{tpu_custom_call.1} parent=1 // pred_check
      _
    $region3: #{tpu_custom_call.1} parent=1 // pred_check_branch
      %12 = sbr.rel (0) target = $region5
    $region4: #{tpu_custom_call.1} parent=1 // pred_region
      %s14 = ssub.s32 32, 32
      %15 = vsyncadd [#allocation3], %s14
      %s17 = sshll.u32 [#allocation2], 4
      %s18 = int_to_ptr.vmem [resolvable:$true] %s17
      %20 = dma.hbm_to_vmem [thread:$0]  %s0, 32, %s18, [#allocation3]
    $region5: #{tpu_custom_call.1} parent=1 // pred_fallthru
      _
    // Predicated region
    $region6: #{tpu_custom_call.1} parent=1 // pred_check
      _
    $region7: #{tpu_custom_call.1} parent=1 // pred_check_branch
      %22 = sbr.rel (0) target = $region9
    $region8: #{tpu_custom_call.1} parent=1 // pred_region
      %s24 = ssub.s32 512, 512
      %25 = vsyncadd [#allocation6], %s24
      %s26 = sshll.u32 [#allocation5], 4
      %s27 = int_to_ptr.vmem [resolvable:$true] %s26
      %32 = dma.hbm_to_vmem [thread:$0]  %s1, 512, %s27, [#allocation6], 128, 128, 8
    $region9: #{tpu_custom_call.1} parent=1 // pred_fallthru
      _
    // Predicated region
    $region10: #{tpu_custom_call.1} parent=1 // pred_check
      _
    $region11: #{tpu_custom_call.1} parent=1 // pred_check_branch
      %34 = sbr.rel (0) target = $region13
    $region12: #{tpu_custom_call.1} parent=1 // pred_region
      _
    $region13: #{tpu_custom_call.1} parent=1 // pred_fallthru
      _
    // Predicated region
    $region14: #{tpu_custom_call.1} parent=1 // pred_check
      _
    $region15: #{tpu_custom_call.1} parent=1 // pred_check_branch
      %36 = sbr.rel (0) target = $region17
    $region16: #{tpu_custom_call.1} parent=1 // pred_region
      %37 = dma.done [#allocation3], 32
    $region17: #{tpu_custom_call.1} parent=1 // pred_fallthru
      _
    // Predicated region
    $region18: #{tpu_custom_call.1} parent=1 // pred_check
      _
    $region19: #{tpu_custom_call.1} parent=1 // pred_check_branch
      %39 = sbr.rel (0) target = $region21
    $region20: #{tpu_custom_call.1} parent=1 // pred_region
      %40 = dma.done [#allocation6], 512
    $region21: #{tpu_custom_call.1} parent=1 // pred_fallthru
      _
    %v41 = vld [vmem:[#allocation2] sm:$0x3]
    %v42 = vld [vmem:[#allocation5] sm:$0xff]
    %v43 = vld [vmem:[#allocation5 + $0x8] sm:$0xff]
    %v44 = vld [vmem:[#allocation5 + $0x10] sm:$0xff]
    %v45 = vld [vmem:[#allocation5 + $0x18] sm:$0xff]
    %v46 = vld [vmem:[%s2] sm:$0x1]
    %v48 = vlaneseq
    %v49 = vshrl.u32 %v48, 7
    %v50 = vsub.s32 0, %v49
    %v51 = vrot.slane %v46, %v50
    %vm53 = vcmask 261120
    %v55 = vsel %vm53, %v41, 0
    %57 = vmatprep.subr.mxu0 0.0
    %58 = vmatpush1.msra.mxu0 %v42
    %59 = vmatprep.subr.mxu0 0.0
    %60 = vmatpush1.msra.mxu0 %v43
    %61 = vmatprep.subr.mxu0 0.0
    %62 = vmatpush1.msra.mxu0 %v44
    %63 = vmatprep.subr.mxu0 0.0
    %64 = vmatpush1.msra.mxu0 %v45
    %65 = vmatprep.subr.mxu0 0.0
    %66 = vmatpush1.msra.mxu0 0.0
    %67 = vmatprep.subr.mxu0 0.0
    %68 = vmatpush1.msra.mxu0 0.0
    %69 = vmatprep.subr.mxu0 0.0
    %70 = vmatpush1.msra.mxu0 0.0
    %71 = vmatprep.subr.mxu0 0.0
    %72 = vmatpush1.msra.mxu0 0.0
    %73 = vmatprep.subr.mxu0 0.0
    %74 = vmatpush1.msra.mxu0 0.0
    %75 = vmatprep.subr.mxu0 0.0
    %76 = vmatpush1.msra.mxu0 0.0
    %77 = vmatprep.subr.mxu0 0.0
    %78 = vmatpush1.msra.mxu0 0.0
    %79 = vmatprep.subr.mxu0 0.0
    %80 = vmatpush1.msra.mxu0 0.0
    %81 = vmatprep.subr.mxu0 0.0
    %82 = vmatpush1.msra.mxu0 0.0
    %83 = vmatprep.subr.mxu0 0.0
    %84 = vmatpush1.msra.mxu0 0.0
    %85 = vmatprep.subr.mxu0 0.0
    %86 = vmatpush1.msra.mxu0 0.0
    %87 = vmatprep.subr.mxu0 0.0
    %88 = vmatpush1.msra.mxu0 0.0
    %89 = vmatprep.subr.mxu0 0.0
    %90 = vmatpush1.msra.mxu0 0.0
    %91 = vmatprep.subr.mxu0 0.0
    %92 = vmatpush1.msra.mxu0 0.0
    %93 = vmatprep.subr.mxu0 0.0
    %94 = vmatpush1.msra.mxu0 0.0
    %95 = vmatprep.subr.mxu0 0.0
    %96 = vmatpush1.msra.mxu0 0.0
    %97 = vmatprep.subr.mxu0 0.0
    %98 = vmatpush1.msra.mxu0 0.0
    %99 = vmatprep.subr.mxu0 0.0
    %100 = vmatpush1.msra.mxu0 0.0
    %101 = vmatprep.subr.mxu0 0.0
    %102 = vmatpush1.msra.mxu0 0.0
    %103 = vmatprep.subr.mxu0 0.0
    %104 = vmatpush1.msra.mxu0 0.0
    %105 = vmatprep.subr.mxu0 0.0
    %106 = vmatpush1.msra.mxu0 0.0
    %107 = vmatprep.subr.mxu0 0.0
    %108 = vmatpush1.msra.mxu0 0.0
    %109 = vmatprep.subr.mxu0 0.0
    %110 = vmatpush1.msra.mxu0 0.0
    %111 = vmatprep.subr.mxu0 0.0
    %112 = vmatpush1.msra.mxu0 0.0
    %113 = vmatprep.subr.mxu0 0.0
    %114 = vmatpush1.msra.mxu0 0.0
    %115 = vmatprep.subr.mxu0 0.0
    %116 = vmatpush1.msra.mxu0 0.0
    %117 = vmatprep.subr.mxu0 0.0
    %118 = vmatpush1.msra.mxu0 0.0
    %119 = vmatprep.subr.mxu0 0.0
    %120 = vmatpush1.msra.mxu0 0.0
    %121 = vmatprep.mubr.f32.mxu0 0.0
    %122 = vmatmul.mubr.f32.gmra.mrb[0].mxu0 %v55
    %v123 = vpop.f32.mrb[0].mxu0
    %v124 = vadd.f32 %v51, %v123
    %v125 = vpop.f32.mrb[0].mxu0
    %126 = vdwg.mxu0
    %127 = vst [vmem:[#allocation7] sm:$0x3] %v124
    // Predicated region
    $region22: #{tpu_custom_call.1} parent=1 // pred_check
      _
    $region23: #{tpu_custom_call.1} parent=1 // pred_check_branch
      %129 = sbr.rel (0) target = $region25
    $region24: #{tpu_custom_call.1} parent=1 // pred_region
      %s131 = ssub.s32 32, 32
      %132 = vsyncadd [#allocation4], %s131
      %s134 = sshll.u32 [#allocation7], 4
      %s135 = int_to_ptr.vmem [resolvable:$true] %s134
      %137 = dma.vmem_to_hbm [thread:$0]  %s135, 32, %s3, [#allocation4]
    $region25: #{tpu_custom_call.1} parent=1 // pred_fallthru
      _
    // Predicated region
    $region26: #{tpu_custom_call.1} parent=1 // pred_check
      _
    $region27: #{tpu_custom_call.1} parent=1 // pred_check_branch
      %139 = sbr.rel (0) target = $region29
    $region28: #{tpu_custom_call.1} parent=1 // pred_region
      %140 = dma.done [#allocation4], 32
    $region29: #{tpu_custom_call.1} parent=1 // pred_fallthru
      _
    %141 = vsyncpa [#allocation3], 1
    %142 = vsyncpa [#allocation6], 1
    %143 = vsyncpa [#allocation4], 1

</llo_original>
